<compile_context>
chip_gen: v7x
topology: tpu7x:2x2x1
jax: 0.10.0
libtpu: 0.0.40
codegen_flags: <defaults>
</compile_context>

<pallas_src>
import jax
import jax.numpy as jnp
from jax import lax
from jax.experimental import pallas as pl
from jax.experimental.pallas import tpu as pltpu


def _round_up(v, m):
    return ((v + m - 1) // m) * m


def _vmem_capacity_bytes():
    try:
        cap = getattr(pltpu.get_tpu_info(), "vmem_capacity_bytes", None)
        if cap:
            return int(cap)
    except Exception:
        pass
    return 64 << 20  # conservative fallback: v7x per-core physical VMEM


def _logreg_kernel(x_ref, w_ref, b_ref, o_ref):
    # x_ref: (tb, N)    f32 VMEM -- streamed batch tile, double-buffered
    # w_ref: (8,  N)    f32 VMEM -- weight row replicated on sublanes, resident
    # b_ref: (1,)       f32 SMEM -- scalar bias
    # o_ref: (1, 1, tb) f32 VMEM -- lane-dense sigmoid outputs for this tile
    x = x_ref[...]
    w = w_ref[...]
    # Contract the feature dim on the MXU (same pattern as q @ k^T in flash
    # attention): result keeps batch on lanes, so no per-row XLU reduce and
    # the store is lane-dense. All 8 result rows are identical; keep row 0.
    scores = lax.dot_general(
        w, x,
        dimension_numbers=(((1,), (1,)), ((), ())),
        preferred_element_type=jnp.float32,
        precision=lax.Precision.HIGHEST,
    )  # (8, tb)
    z = scores[0:1, :] + b_ref[0]                 # (1, tb)
    # sigmoid = 1/(1+exp(-z)); exp runs on the otherwise-idle EUP slot.
    o_ref[0, :, :] = 1.0 / (1.0 + jnp.exp(-z))


def logistic_regression(x, weight, bias, *, block_batch=None):
    """sigmoid(x @ weight.T + bias), matching nn.Linear(n_input, 1) + sigmoid.

    x: (B, N) f32, weight: (1, N) f32, bias: (1,) f32 -> (B, 1) f32.
    """
    B, N = x.shape
    x = x.astype(jnp.float32)
    w_rep = jnp.broadcast_to(jnp.reshape(weight, (1, N)), (8, N)).astype(jnp.float32)
    bias = jnp.reshape(bias, (1,)).astype(jnp.float32)

    # --- Generation-aware tile sizing --------------------------------------
    vmem_limit = min(_vmem_capacity_bytes() * 3 // 4, 100 << 20)  # v7x ~48MiB, v5e/v6e ~96MiB
    # Per x-buffer target: big enough to amortize the ~0.35us per-grid-step
    # overhead against the HBM stream, small enough that 2 x buffers + 2
    # lane-dense output rows + resident weight + matmul scratch stay well
    # under the scoped limit on every generation.
    per_buf = min(max(vmem_limit // 8, 1 << 20), 8 << 20)
    tb = max(8, (per_buf // (N * 4)) // 8 * 8)
    # Keep several grid steps for megacore balance (v7x has 2 TensorCores),
    # but never shrink the tile below 1024 rows for that.
    tb_for_8_steps = _round_up(max(1, -(-B // 8)), 8)
    tb = min(tb, max(tb_for_8_steps, 1024))
    tb = min(tb, _round_up(B, 8))
    if block_batch is not None:
        tb = min(tb, max(8, _round_up(block_batch, 8)))

    num_tiles = -(-B // tb)   # cdiv; last tile may be ragged (no host-side pad)
    grid = (num_tiles,)

    # TODO(synk): for extreme feature counts (N ~ 1e5+) add a second
    # "arbitrary" grid axis over N with an f32 accumulator; a single (tb, N)
    # tile per step is the memory-bound optimum for typical feature counts.
    out = pl.pallas_call(
        _logreg_kernel,
        out_shape=jax.ShapeDtypeStruct((num_tiles, 1, tb), jnp.float32),
        grid=grid,
        in_specs=[
            # x: one (tb, N) tile per grid step, auto double-buffered; the
            # final tile is ragged (boundary DMA clamped by Pallas, garbage
            # rows are discarded by the wrapper slice).
            pl.BlockSpec((tb, N), lambda i: (i, 0)),
            # weight: fetched once, stays resident in VMEM for every tile.
            pl.BlockSpec((8, N), lambda i: (0, 0)),
            # bias: scalar in SMEM (no VMEM tile, no vector load).
            pl.BlockSpec(memory_space=pltpu.MemorySpace.SMEM),
        ],
        # lane-dense output: one (1, tb) row per grid step.
        out_specs=pl.BlockSpec((1, 1, tb), lambda i: (i, 0, 0)),
        compiler_params=pltpu.CompilerParams(
            dimension_semantics=("parallel",),
            vmem_limit_bytes=int(vmem_limit),
        ),
    )(x, w_rep, bias)

    # (num_tiles, 1, tb) -> (num_tiles*tb, 1); drop ragged-tail garbage rows.
    return out.reshape(num_tiles * tb, 1)[:B]


if __name__ == "__main__":
    # Small, deterministic setup; block_batch=64 exercises a multi-step grid
    # plus a ragged final tile (200 = 3*64 + 8).
    batch, n_input = 200, 64
    key = jax.random.PRNGKey(0)
    kx, kw, kb = jax.random.split(key, 3)

    x = jax.random.normal(kx, (batch, n_input), dtype=jnp.float32)

    # Deterministic parameter init mimicking nn.Linear's U(-1/sqrt(N), 1/sqrt(N)).
    bound = 1.0 / jnp.sqrt(jnp.float32(n_input))
    weight = jax.random.uniform(kw, (1, n_input), dtype=jnp.float32,
                                minval=-bound, maxval=bound)
    bias = jax.random.uniform(kb, (1,), dtype=jnp.float32,
                              minval=-bound, maxval=bound)

    y = logistic_regression(x, weight, bias, block_batch=64)
    y = jax.block_until_ready(y)

    # Reference in plain JAX (elementwise f32 multiply-reduce, no dot
    # precision ambiguity), same math as nn.Linear(N, 1) + sigmoid.
    y_ref = jax.nn.sigmoid(jnp.sum(x * weight, axis=-1, keepdims=True)
                           + bias[None, :])
    assert y.shape == (batch, 1)
    assert jnp.allclose(y, y_ref, atol=1e-5, rtol=1e-5), \
        float(jnp.max(jnp.abs(y - y_ref)))

    # NOTE: the PyTorch forward() has no `return` statement (returns None);
    # we expose the computed y_pred here since that is the intended compute.
    print("KERNEL_OK")
</pallas_src>

<mosaic_0001>
module attributes {stable_mosaic.version = 11 : i64} {
  func.func @_logreg_kernel(%arg0: i32, %arg1: memref<64x64xf32, #tpu.memory_space<vmem>>, %arg2: memref<8x64xf32, #tpu.memory_space<vmem>>, %arg3: memref<1xf32, #tpu.memory_space<smem>>, %arg4: memref<1x1x64xf32, #tpu.memory_space<vmem>>) attributes {dimension_semantics = [#tpu.dimension_semantics<parallel>], iteration_bounds = array<i64: 4>, scalar_prefetch = 0 : i64, scratch_operands = 0 : i64, tpu.core_type = #tpu.core_type<tc>, window_params = [{transform_indices = @transform_0, window_bounds = array<i64: 64, 64>}, {pipeline_mode = #tpu.pipeline_mode<synchronous>, transform_indices = @transform_1, window_bounds = array<i64: 8, 64>}, {transform_indices = @transform_2, window_bounds = array<i64: 1>}, {transform_indices = @transform_3, window_bounds = array<i64: 1, 1, 64>}]} {
    %c0 = arith.constant 0 : index
    %c0_0 = arith.constant 0 : index
    %0 = vector.load %arg1[%c0, %c0_0] : memref<64x64xf32, #tpu.memory_space<vmem>>, vector<64x64xf32>
    %c0_1 = arith.constant 0 : index
    %c0_2 = arith.constant 0 : index
    %1 = vector.load %arg2[%c0_1, %c0_2] : memref<8x64xf32, #tpu.memory_space<vmem>>, vector<8x64xf32>
    %cst = arith.constant dense<0.000000e+00> : vector<8x64xf32>
    %2 = tpu.matmul %1, %0, %cst {dimension_numbers = #tpu.dot_dimension_numbers<[1], [1], [0], [0], [0, 0, 1, 0], [], []>, precision = #tpu.contract_precision<fp32>} : vector<8x64xf32>, vector<64x64xf32>, vector<8x64xf32> -> vector<8x64xf32>
    %3 = vector.extract_strided_slice %2 {offsets = [0, 0], sizes = [1, 64], strides = [1, 1]} : vector<8x64xf32> to vector<1x64xf32>
    %c0_3 = arith.constant 0 : index
    %4 = memref.load %arg3[%c0_3] : memref<1xf32, #tpu.memory_space<smem>>
    %5 = vector.broadcast %4 : f32 to vector<1x64xf32>
    %6 = arith.addf %3, %5 : vector<1x64xf32>
    %cst_4 = arith.constant 0.000000e+00 : f32
    %7 = vector.broadcast %cst_4 : f32 to vector<1x64xf32>
    %8 = arith.subf %7, %6 : vector<1x64xf32>
    %9 = math.exp %8 : vector<1x64xf32>
    %cst_5 = arith.constant 1.000000e+00 : f32
    %10 = vector.broadcast %cst_5 : f32 to vector<1x64xf32>
    %11 = arith.addf %10, %9 : vector<1x64xf32>
    %cst_6 = arith.constant 1.000000e+00 : f32
    %12 = vector.broadcast %cst_6 : f32 to vector<1x64xf32>
    %13 = arith.divf %12, %11 : vector<1x64xf32>
    %c0_7 = arith.constant 0 : index
    %c0_8 = arith.constant 0 : index
    %c0_9 = arith.constant 0 : index
    %14 = vector.load %arg4[%c0_7, %c0_8, %c0_9] : memref<1x1x64xf32, #tpu.memory_space<vmem>>, vector<1x1x64xf32>
    %15 = vector.shape_cast %14 : vector<1x1x64xf32> to vector<1x64xf32>
    %16 = vector.shape_cast %13 : vector<1x64xf32> to vector<1x1x64xf32>
    tpu.vector_store %arg4[%c0_7, %c0_8, %c0_9], %16 {strides = array<i32>} : memref<1x1x64xf32, #tpu.memory_space<vmem>>, vector<1x1x64xf32>,
    return
  }
  func.func @transform_0(%arg0: i32) -> (i32, i32) {
    %c0_i32 = arith.constant 0 : i32
    %c0_i32_0 = arith.constant 0 : i32
    return %arg0, %c0_i32 : i32, i32
  }
  func.func @transform_1(%arg0: i32) -> (i32, i32) {
    %c0_i32 = arith.constant 0 : i32
    %c0_i32_0 = arith.constant 0 : i32
    %c0_i32_1 = arith.constant 0 : i32
    return %c0_i32, %c0_i32_0 : i32, i32
  }
  func.func @transform_2(%arg0: i32) -> i32 {
    %c0_i32 = arith.constant 0 : i32
    %c0_i32_0 = arith.constant 0 : i32
    return %c0_i32 : i32
  }
  func.func @transform_3(%arg0: i32) -> (i32, i32, i32) {
    %c0_i32 = arith.constant 0 : i32
    %c0_i32_0 = arith.constant 0 : i32
    %c0_i32_1 = arith.constant 0 : i32
    return %arg0, %c0_i32, %c0_i32_0 : i32, i32, i32
  }
}

</mosaic_0001>

<llo_original>
// kernel: tpu_custom_call.1
$region0: #{tpu_custom_call.1}
  #allocation0 [shape = 'u32[]', space=smem, size = 0x4, offset = 0x4, fixed_abs, tag = 'smem constant byte address 0x4 - core index']
  #allocation1 [shape = 'u32[144,128]{1,0:T(1,128)}', space=vmem, size = 0x12000, scoped, tag = 'internal scratch']
  #allocation2 [shape = 'f32[1]{0:T(128)S(6)}', space=smem, size = 0x200, scoped, tag = 'scoped memory for tpu_custom_call.1']
  %s0 = inlined_call_operand.vmem [shape: f32[200,64], index: 0, kind: input, shape index: {}]
  %s1 = inlined_call_operand.vmem [shape: f32[8,64], index: 1, kind: input, shape index: {}]
  %s2 = inlined_call_operand.<no memory space> [shape: f32[1], index: 2, kind: input, shape index: {}]
  %s3 = inlined_call_operand.hbm [shape: f32[4,1,64], index: 3, kind: output, shape index: {}]
  %s4 = sld [smem:[#allocation0]]
  $region45: #{tpu_custom_call.1} parent=0
    _
  %s6 = ssub.s32 1, %s4
  %s7 = scalar_select 0, %s6, %s4
  %8 = sst [smem:[#allocation2]] %s2
  $region1: #{tpu_custom_call.1} parent=0
    #allocation3 [shape = 'u8[1024]{0}', space=vmem, size = 0x400, scoped, tag = 'output window, operand 0']
    #allocation4 [shape = 's32[2]{0}', space=sflag, size = 0x8, scoped, tag = 'scoped memory for tpu_custom_call.1']
    %9 = vsyncpa [#allocation4], 0
    %s10 = scalar_lea.sflag [#allocation4], 1
    %11 = vsyncpa %s10, 0
    loop: start=0, step=1, limit=6
    $region2: #{tpu_custom_call.1} parent=1 // loop_pre_header
      _
    $region3: #{tpu_custom_call.1} parent=1 // loop_header
      %s13 = sphi 0, %s17
      %p14 = scmp.ge.s32.totalorder %s13, 6
      %s23 = sphi 0, %s25
      %s26 = sphi 0, %s23
      %s27 = sphi 0, %s26
      %s43 = sphi 0, %s27
      %s47 = sphi 0, %s47
      %s49 = sphi 0, %s47
      %s50 = sphi 0, %s49
      %s64 = sphi 0, %s50
      %s68 = sphi 0, %s68
      %s70 = sphi 0, %s68
      %s71 = sphi 0, %s70
      %s85 = sphi 0, %s71
      %s91 = sphi 0, %s93
      %s94 = sphi 0, %s91
      %s95 = sphi 0, %s94
      %s111 = sphi 0, %s95
    $region4: #{tpu_custom_call.1} parent=1 // loop_header_branch
      %16 = sbr.rel (%p14) target = $region8
    $region5: #{tpu_custom_call.1} parent=1 // loop_body
      %s18 = ssub.s32 %s13, 1
      %s19 = ssub.s32 %s13, 2
      %s20 = sadd.s32 %s13, 1
      %s21 = ssub.s32 %s13, %s20
      %p22 = scmp.eq.s32.totalorder %s21, 0
      %s24 = sadd.s32 %s23, 1
      %s25 = scalar_select %p22, %s23, %s24
      %p28 = pneg %p22
      %p29 = scmp.eq.s32.totalorder %s13, 3
      %p30 = por %p28, %p29
      %p31 = scmp.ne.s32.totalorder %s23, %s26
      %p32 = scmp.eq.s32.totalorder %s13, 0
      %p33 = por %p31, %p32
      %p34 = scmp.ne.s32.totalorder %s23, %s26
      %p35 = scmp.eq.s32.totalorder %s18, 3
      %p36 = por %p34, %p35
      %p37 = scmp.ne.s32.totalorder %s26, %s27
      %p38 = scmp.eq.s32.totalorder %s18, 0
      %p39 = por %p37, %p38
      %p40 = scmp.ne.s32.totalorder %s26, %s27
      %p41 = scmp.eq.s32.totalorder %s19, 3
      %p42 = por %p40, %p41
      %p44 = scmp.ne.s32.totalorder %s27, %s43
      %p45 = scmp.eq.s32.totalorder %s19, 0
      %p46 = por %p44, %p45
      %s48 = sadd.s32 %s47, 1
      %p51 = scmp.eq.s32.totalorder %s13, 3
      %p52 = scmp.ne.s32.totalorder %s47, %s49
      %p53 = scmp.eq.s32.totalorder %s13, 0
      %p54 = por %p52, %p53
      %p55 = scmp.ne.s32.totalorder %s47, %s49
      %p56 = scmp.eq.s32.totalorder %s18, 3
      %p57 = por %p55, %p56
      %p58 = scmp.ne.s32.totalorder %s49, %s50
      %p59 = scmp.eq.s32.totalorder %s18, 0
      %p60 = por %p58, %p59
      %p61 = scmp.ne.s32.totalorder %s49, %s50
      %p62 = scmp.eq.s32.totalorder %s19, 3
      %p63 = por %p61, %p62
      %p65 = scmp.ne.s32.totalorder %s50, %s64
      %p66 = scmp.eq.s32.totalorder %s19, 0
      %p67 = por %p65, %p66
      %s69 = sadd.s32 %s68, 1
      %p72 = scmp.eq.s32.totalorder %s13, 3
      %p73 = scmp.ne.s32.totalorder %s68, %s70
      %p74 = scmp.eq.s32.totalorder %s13, 0
      %p75 = por %p73, %p74
      %p76 = scmp.ne.s32.totalorder %s68, %s70
      %p77 = scmp.eq.s32.totalorder %s18, 3
      %p78 = por %p76, %p77
      %p79 = scmp.ne.s32.totalorder %s70, %s71
      %p80 = scmp.eq.s32.totalorder %s18, 0
      %p81 = por %p79, %p80
      %p82 = scmp.ne.s32.totalorder %s70, %s71
      %p83 = scmp.eq.s32.totalorder %s19, 3
      %p84 = por %p82, %p83
      %p86 = scmp.ne.s32.totalorder %s71, %s85
      %p87 = scmp.eq.s32.totalorder %s19, 0
      %p88 = por %p86, %p87
      %s89 = ssub.s32 %s13, %s20
      %p90 = scmp.eq.s32.totalorder %s89, 0
      %s92 = sadd.s32 %s91, 1
      %s93 = scalar_select %p90, %s91, %s92
      %p96 = pneg %p90
      %p97 = scmp.eq.s32.totalorder %s13, 3
      %p98 = por %p96, %p97
      %p99 = scmp.ne.s32.totalorder %s91, %s94
      %p100 = scmp.eq.s32.totalorder %s13, 0
      %p101 = por %p99, %p100
      %p102 = scmp.ne.s32.totalorder %s91, %s94
      %p103 = scmp.eq.s32.totalorder %s18, 3
      %p104 = por %p102, %p103
      %p105 = scmp.ne.s32.totalorder %s94, %s95
      %p106 = scmp.eq.s32.totalorder %s18, 0
      %p107 = por %p105, %p106
      %p108 = scmp.ne.s32.totalorder %s94, %s95
      %p109 = scmp.eq.s32.totalorder %s19, 3
      %p110 = por %p108, %p109
      %p112 = scmp.ne.s32.totalorder %s95, %s111
      %p113 = scmp.eq.s32.totalorder %s19, 0
      %p114 = por %p112, %p113
      %p115 = scmp.le.s32.totalorder 1, %s13
      %p116 = scmp.lt.s32.totalorder %s13, 5
      %p117 = pnand %p115, %p116
      %p118 = pneg %p117
      // Predicated region
      $region9: #{tpu_custom_call.1} parent=5 // pred_check
        _
      $region10: #{tpu_custom_call.1} parent=5 // pred_check_branch
        %120 = sbr.rel (%p117) target = $region12
      $region11: #{tpu_custom_call.1} parent=5 // pred_region
        %s121 = ssub.s32 %s13, 1
        // Predicated region
        $region13: #{tpu_custom_call.1} parent=11 // pred_check
          %p122 = pneg %p60
        $region14: #{tpu_custom_call.1} parent=11 // pred_check_branch
          %124 = sbr.rel (%p122) target = $region16
        $region15: #{tpu_custom_call.1} parent=11 // pred_region
          _
        $region16: #{tpu_custom_call.1} parent=11 // pred_fallthru
          _
        // Predicated region
        $region17: #{tpu_custom_call.1} parent=11 // pred_check
          %p125 = pneg %p81
        $region18: #{tpu_custom_call.1} parent=11 // pred_check_branch
          %127 = sbr.rel (%p125) target = $region20
        $region19: #{tpu_custom_call.1} parent=11 // pred_region
          _
        $region20: #{tpu_custom_call.1} parent=11 // pred_fallthru
          _
      $region12: #{tpu_custom_call.1} parent=5 // pred_fallthru
        _
      %p128 = scmp.lt.s32.totalorder %s13, 4
      // Predicated region
      $region21: #{tpu_custom_call.1} parent=5 // pred_check
        %p129 = pneg %p128
      $region22: #{tpu_custom_call.1} parent=5 // pred_check_branch
        %131 = sbr.rel (%p129) target = $region24
      $region23: #{tpu_custom_call.1} parent=5 // pred_region
        // Predicated region
        $region25: #{tpu_custom_call.1} parent=23 // pred_check
          %p132 = pneg %p33
        $region26: #{tpu_custom_call.1} parent=23 // pred_check_branch
          %134 = sbr.rel (%p132) target = $region28
        $region27: #{tpu_custom_call.1} parent=23 // pred_region
          %s135 = smul.u32 8, %s13
          %s136 = ssub.s32 25, %s135
          %p137 = scmp.lt.s32.totalorder %s136, 8
          %s138 = scalar_select %p137, %s136, 8
          %s139 = smul.u32 128, %s138
          %p140 = scmp.lt.s32.totalorder %s135, 24
          %s141 = scalar_select %p140, %s135, 24
          %s142 = smul.addr %s141, 8
          %s143 = scalar_lea.vmem %s0, %s142
          %s144 = smul.u32 8, %s13
          %s145 = ssub.s32 25, %s144
          %p146 = scmp.lt.s32.totalorder %s145, 8
          %s147 = scalar_select %p146, %s145, 8
          %s148 = smul.u32 128, %s147
        $region28: #{tpu_custom_call.1} parent=23 // pred_fallthru
          _
      $region24: #{tpu_custom_call.1} parent=5 // pred_fallthru
        _
      %p149 = scmp.le.s32.totalorder 1, %s13
      %p150 = scmp.lt.s32.totalorder %s13, 5
      %p151 = pnand %p149, %p150
      %p152 = pneg %p151
      // Predicated region
      $region29: #{tpu_custom_call.1} parent=5 // pred_check
        _
      $region30: #{tpu_custom_call.1} parent=5 // pred_check_branch
        %154 = sbr.rel (%p151) target = $region32
      $region31: #{tpu_custom_call.1} parent=5 // pred_region
        %s155 = ssub.s32 %s13, 1
        %s156 = smul.u32 8, %s18
        %s157 = ssub.s32 25, %s156
        %p158 = scmp.lt.s32.totalorder %s157, 8
        %s159 = scalar_select %p158, %s157, 8
        %s160 = smul.u32 128, %s159
        %p161 = scmp.lt.s32.totalorder %s156, 24
        %s162 = scalar_select %p161, %s156, 24
        %s163 = smul.addr %s162, 8
        %s164 = scalar_lea.vmem %s0, %s163
        %p165 = pneg %p39
        %p166 = pneg %p36
        %p167 = pneg %p60
        %p168 = pneg %p57
        %p169 = pneg %p81
        %p170 = pneg %p78
        %p171 = pneg %p107
        %p172 = pneg %p104
        %s173 = sand.u32 %s94, 1
        %s174 = scalar_lea.sflag [#allocation4], %s173
        %s175 = sand.u32 %s94, 1
        %s176 = scalar_lea.vmem [#allocation3], %s175
        %s177 = smul.u32 8, %s18
        %s178 = ssub.s32 25, %s177
        %p179 = scmp.lt.s32.totalorder %s178, 8
        %s180 = scalar_select %p179, %s178, 8
        %s181 = smul.u32 128, %s180
        %p182 = scmp.lt.s32.totalorder %s177, 24
        %s183 = scalar_select %p182, %s177, 24
        %s184 = smul.addr %s183, 8
        %s185 = scalar_lea.vmem %s0, %s184
        %s186 = smul.u32 8, %s18
        %s187 = ssub.s32 25, %s186
        %p188 = scmp.lt.s32.totalorder %s187, 8
        %s189 = scalar_select %p188, %s187, 8
        %s190 = smul.u32 128, %s189
        %v191 = vld [vmem:[%s185] sm:$0xff]
        %v192 = vld [vmem:[%s185 + $0x8] sm:$0xff]
        %v193 = vld [vmem:[%s185 + $0x10] sm:$0xff]
        %v194 = vld [vmem:[%s185 + $0x18] sm:$0xff]
        %v195 = vld [vmem:[%s185 + $0x20] sm:$0xff]
        %v196 = vld [vmem:[%s185 + $0x28] sm:$0xff]
        %v197 = vld [vmem:[%s185 + $0x30] sm:$0xff]
        %v198 = vld [vmem:[%s185 + $0x38] sm:$0xff]
        %v199 = vld [vmem:[%s1] sm:$0xff]
        %vm200 = vcmask 523264
        %v202 = vsel %vm200, %v199, 0
        %v205 = vsel %vm200, %v191, 0
        %v208 = vsel %vm200, %v192, 0
        %v211 = vsel %vm200, %v193, 0
        %v214 = vsel %vm200, %v194, 0
        %v217 = vsel %vm200, %v195, 0
        %v220 = vsel %vm200, %v196, 0
        %v223 = vsel %vm200, %v197, 0
        %v226 = vsel %vm200, %v198, 0
        %228 = vmatprep.subr.mxu0 0.0
        %v229 = vand.u32 %v205, 4294901760
        %230 = vmatpush1.xpose.msra.mxu0 %v229
        %231 = vmatprep.subr.mxu0 0.0
        %v232 = vand.u32 %v208, 4294901760
        %233 = vmatpush1.xpose.msra.mxu0 %v232
        %234 = vmatprep.subr.mxu0 0.0
        %v235 = vand.u32 %v211, 4294901760
        %236 = vmatpush1.xpose.msra.mxu0 %v235
        %237 = vmatprep.subr.mxu0 0.0
        %v238 = vand.u32 %v214, 4294901760
        %239 = vmatpush1.xpose.msra.mxu0 %v238
        %240 = vmatprep.subr.mxu0 0.0
        %v241 = vand.u32 %v217, 4294901760
        %242 = vmatpush1.xpose.msra.mxu0 %v241
        %243 = vmatprep.subr.mxu0 0.0
        %v244 = vand.u32 %v220, 4294901760
        %245 = vmatpush1.xpose.msra.mxu0 %v244
        %246 = vmatprep.subr.mxu0 0.0
        %v247 = vand.u32 %v223, 4294901760
        %248 = vmatpush1.xpose.msra.mxu0 %v247
        %249 = vmatprep.subr.mxu0 0.0
        %v250 = vand.u32 %v226, 4294901760
        %251 = vmatpush1.xpose.msra.mxu0 %v250
        %252 = vmatprep.subr.mxu0 0.0
        %253 = vmatpush1.xpose.msra.mxu0 0.0
        %254 = vmatprep.subr.mxu0 0.0
        %255 = vmatpush1.xpose.msra.mxu0 0.0
        %256 = vmatprep.subr.mxu0 0.0
        %257 = vmatpush1.xpose.msra.mxu0 0.0
        %258 = vmatprep.subr.mxu0 0.0
        %259 = vmatpush1.xpose.msra.mxu0 0.0
        %260 = vmatprep.subr.mxu0 0.0
        %261 = vmatpush1.xpose.msra.mxu0 0.0
        %262 = vmatprep.subr.mxu0 0.0
        %263 = vmatpush1.xpose.msra.mxu0 0.0
        %264 = vmatprep.subr.mxu0 0.0
        %265 = vmatpush1.xpose.msra.mxu0 0.0
        %266 = vmatprep.subr.mxu0 0.0
        %267 = vmatpush1.xpose.msra.mxu0 0.0
        %268 = vmatprep.subr.mxu0 0.0
        %269 = vmatpush1.xpose.msra.mxu0 0.0
        %270 = vmatprep.subr.mxu0 0.0
        %271 = vmatpush1.xpose.msra.mxu0 0.0
        %272 = vmatprep.subr.mxu0 0.0
        %273 = vmatpush1.xpose.msra.mxu0 0.0
        %274 = vmatprep.subr.mxu0 0.0
        %275 = vmatpush1.xpose.msra.mxu0 0.0
        %276 = vmatprep.subr.mxu0 0.0
        %277 = vmatpush1.xpose.msra.mxu0 0.0
        %278 = vmatprep.subr.mxu0 0.0
        %279 = vmatpush1.xpose.msra.mxu0 0.0
        %280 = vmatprep.subr.mxu0 0.0
        %281 = vmatpush1.xpose.msra.mxu0 0.0
        %282 = vmatprep.subr.mxu0 0.0
        %283 = vmatpush1.xpose.msra.mxu0 0.0
        %284 = vmatprep.subr.mxu0 0.0
        %285 = vmatpush1.xpose.msra.mxu0 0.0
        %286 = vmatprep.subr.mxu0 0.0
        %287 = vmatpush1.xpose.msra.mxu0 0.0
        %288 = vmatprep.subr.mxu0 0.0
        %289 = vmatpush1.xpose.msra.mxu0 0.0
        %290 = vmatprep.subr.mxu0 0.0
        %291 = vmatpush1.xpose.msra.mxu0 0.0
        %292 = vmatprep.subr.mxu0 0.0
        %293 = vmatpush1.xpose.msra.mxu0 0.0
        %294 = vmatprep.subr.mxu0 0.0
        %295 = vmatpush1.xpose.msra.mxu0 0.0
        %296 = vmatprep.subr.mxu0 0.0
        %297 = vmatpush1.xpose.msra.mxu0 0.0
        %298 = vmatprep.subr.mxu0 0.0
        %299 = vmatpush1.xpose.msra.mxu0 0.0
        %300 = vmatprep.mubr.f32.mxu0 0.0
        %v301 = vand.u32 %v202, 4294901760
        %v302 = vsub.f32 %v202, %v301
        %v303 = vand.u32 %v302, 4294901760
        %v304 = vsub.f32 %v302, %v303
        %v305 = vand.u32 %v304, 4294901760
        %306 = vmatmul.mubr.f32.gmra.mrb[0].mxu0 %v305
        %v307 = vpop.f32.mrb[0].mxu0
        %v308 = vadd.f32 0.0, %v307
        %v309 = vpop.f32.mrb[0].mxu0
        %310 = vdwg.mxu0
        %311 = vmatprep.subr.mxu0 0.0
        %v312 = vand.u32 %v205, 4294901760
        %v313 = vsub.f32 %v205, %v312
        %v314 = vand.u32 %v313, 4294901760
        %v315 = vsub.f32 %v313, %v314
        %v316 = vand.u32 %v315, 4294901760
        %317 = vmatpush1.xpose.msra.mxu0 %v316
        %318 = vmatprep.subr.mxu0 0.0
        %v319 = vand.u32 %v208, 4294901760
        %v320 = vsub.f32 %v208, %v319
        %v321 = vand.u32 %v320, 4294901760
        %v322 = vsub.f32 %v320, %v321
        %v323 = vand.u32 %v322, 4294901760
        %324 = vmatpush1.xpose.msra.mxu0 %v323
        %325 = vmatprep.subr.mxu0 0.0
        %v326 = vand.u32 %v211, 4294901760
        %v327 = vsub.f32 %v211, %v326
        %v328 = vand.u32 %v327, 4294901760
        %v329 = vsub.f32 %v327, %v328
        %v330 = vand.u32 %v329, 4294901760
        %331 = vmatpush1.xpose.msra.mxu0 %v330
        %332 = vmatprep.subr.mxu0 0.0
        %v333 = vand.u32 %v214, 4294901760
        %v334 = vsub.f32 %v214, %v333
        %v335 = vand.u32 %v334, 4294901760
        %v336 = vsub.f32 %v334, %v335
        %v337 = vand.u32 %v336, 4294901760
        %338 = vmatpush1.xpose.msra.mxu0 %v337
        %339 = vmatprep.subr.mxu0 0.0
        %v340 = vand.u32 %v217, 4294901760
        %v341 = vsub.f32 %v217, %v340
        %v342 = vand.u32 %v341, 4294901760
        %v343 = vsub.f32 %v341, %v342
        %v344 = vand.u32 %v343, 4294901760
        %345 = vmatpush1.xpose.msra.mxu0 %v344
        %346 = vmatprep.subr.mxu0 0.0
        %v347 = vand.u32 %v220, 4294901760
        %v348 = vsub.f32 %v220, %v347
        %v349 = vand.u32 %v348, 4294901760
        %v350 = vsub.f32 %v348, %v349
        %v351 = vand.u32 %v350, 4294901760
        %352 = vmatpush1.xpose.msra.mxu0 %v351
        %353 = vmatprep.subr.mxu0 0.0
        %v354 = vand.u32 %v223, 4294901760
        %v355 = vsub.f32 %v223, %v354
        %v356 = vand.u32 %v355, 4294901760
        %v357 = vsub.f32 %v355, %v356
        %v358 = vand.u32 %v357, 4294901760
        %359 = vmatpush1.xpose.msra.mxu0 %v358
        %360 = vmatprep.subr.mxu0 0.0
        %v361 = vand.u32 %v226, 4294901760
        %v362 = vsub.f32 %v226, %v361
        %v363 = vand.u32 %v362, 4294901760
        %v364 = vsub.f32 %v362, %v363
        %v365 = vand.u32 %v364, 4294901760
        %366 = vmatpush1.xpose.msra.mxu0 %v365
        %367 = vmatprep.subr.mxu0 0.0
        %368 = vmatpush1.xpose.msra.mxu0 0.0
        %369 = vmatprep.subr.mxu0 0.0
        %370 = vmatpush1.xpose.msra.mxu0 0.0
        %371 = vmatprep.subr.mxu0 0.0
        %372 = vmatpush1.xpose.msra.mxu0 0.0
        %373 = vmatprep.subr.mxu0 0.0
        %374 = vmatpush1.xpose.msra.mxu0 0.0
        %375 = vmatprep.subr.mxu0 0.0
        %376 = vmatpush1.xpose.msra.mxu0 0.0
        %377 = vmatprep.subr.mxu0 0.0
        %378 = vmatpush1.xpose.msra.mxu0 0.0
        %379 = vmatprep.subr.mxu0 0.0
        %380 = vmatpush1.xpose.msra.mxu0 0.0
        %381 = vmatprep.subr.mxu0 0.0
        %382 = vmatpush1.xpose.msra.mxu0 0.0
        %383 = vmatprep.subr.mxu0 0.0
        %384 = vmatpush1.xpose.msra.mxu0 0.0
        %385 = vmatprep.subr.mxu0 0.0
        %386 = vmatpush1.xpose.msra.mxu0 0.0
        %387 = vmatprep.subr.mxu0 0.0
        %388 = vmatpush1.xpose.msra.mxu0 0.0
        %389 = vmatprep.subr.mxu0 0.0
        %390 = vmatpush1.xpose.msra.mxu0 0.0
        %391 = vmatprep.subr.mxu0 0.0
        %392 = vmatpush1.xpose.msra.mxu0 0.0
        %393 = vmatprep.subr.mxu0 0.0
        %394 = vmatpush1.xpose.msra.mxu0 0.0
        %395 = vmatprep.subr.mxu0 0.0
        %396 = vmatpush1.xpose.msra.mxu0 0.0
        %397 = vmatprep.subr.mxu0 0.0
        %398 = vmatpush1.xpose.msra.mxu0 0.0
        %399 = vmatprep.subr.mxu0 0.0
        %400 = vmatpush1.xpose.msra.mxu0 0.0
        %401 = vmatprep.subr.mxu0 0.0
        %402 = vmatpush1.xpose.msra.mxu0 0.0
        %403 = vmatprep.subr.mxu0 0.0
        %404 = vmatpush1.xpose.msra.mxu0 0.0
        %405 = vmatprep.subr.mxu0 0.0
        %406 = vmatpush1.xpose.msra.mxu0 0.0
        %407 = vmatprep.subr.mxu0 0.0
        %408 = vmatpush1.xpose.msra.mxu0 0.0
        %409 = vmatprep.subr.mxu0 0.0
        %410 = vmatpush1.xpose.msra.mxu0 0.0
        %411 = vmatprep.subr.mxu0 0.0
        %412 = vmatpush1.xpose.msra.mxu0 0.0
        %413 = vmatprep.subr.mxu0 0.0
        %414 = vmatpush1.xpose.msra.mxu0 0.0
        %415 = vmatprep.mubr.f32.mxu0 0.0
        %v416 = vand.u32 %v202, 4294901760
        %417 = vmatmul.mubr.f32.gmra.mrb[0].mxu0 %v416
        %v418 = vpop.f32.mrb[0].mxu0
        %v419 = vadd.f32 %v308, %v418
        %v420 = vpop.f32.mrb[0].mxu0
        %421 = vdwg.mxu0
        %422 = vmatprep.subr.mxu0 0.0
        %v423 = vand.u32 %v205, 4294901760
        %v424 = vsub.f32 %v205, %v423
        %425 = vmatpush1.xpose.msra.mxu0 %v424
        %426 = vmatprep.subr.mxu0 0.0
        %v427 = vand.u32 %v208, 4294901760
        %v428 = vsub.f32 %v208, %v427
        %429 = vmatpush1.xpose.msra.mxu0 %v428
        %430 = vmatprep.subr.mxu0 0.0
        %v431 = vand.u32 %v211, 4294901760
        %v432 = vsub.f32 %v211, %v431
        %433 = vmatpush1.xpose.msra.mxu0 %v432
        %434 = vmatprep.subr.mxu0 0.0
        %v435 = vand.u32 %v214, 4294901760
        %v436 = vsub.f32 %v214, %v435
        %437 = vmatpush1.xpose.msra.mxu0 %v436
        %438 = vmatprep.subr.mxu0 0.0
        %v439 = vand.u32 %v217, 4294901760
        %v440 = vsub.f32 %v217, %v439
        %441 = vmatpush1.xpose.msra.mxu0 %v440
        %442 = vmatprep.subr.mxu0 0.0
        %v443 = vand.u32 %v220, 4294901760
        %v444 = vsub.f32 %v220, %v443
        %445 = vmatpush1.xpose.msra.mxu0 %v444
        %446 = vmatprep.subr.mxu0 0.0
        %v447 = vand.u32 %v223, 4294901760
        %v448 = vsub.f32 %v223, %v447
        %449 = vmatpush1.xpose.msra.mxu0 %v448
        %450 = vmatprep.subr.mxu0 0.0
        %v451 = vand.u32 %v226, 4294901760
        %v452 = vsub.f32 %v226, %v451
        %453 = vmatpush1.xpose.msra.mxu0 %v452
        %454 = vmatprep.subr.mxu0 0.0
        %455 = vmatpush1.xpose.msra.mxu0 0.0
        %456 = vmatprep.subr.mxu0 0.0
        %457 = vmatpush1.xpose.msra.mxu0 0.0
        %458 = vmatprep.subr.mxu0 0.0
        %459 = vmatpush1.xpose.msra.mxu0 0.0
        %460 = vmatprep.subr.mxu0 0.0
        %461 = vmatpush1.xpose.msra.mxu0 0.0
        %462 = vmatprep.subr.mxu0 0.0
        %463 = vmatpush1.xpose.msra.mxu0 0.0
        %464 = vmatprep.subr.mxu0 0.0
        %465 = vmatpush1.xpose.msra.mxu0 0.0
        %466 = vmatprep.subr.mxu0 0.0
        %467 = vmatpush1.xpose.msra.mxu0 0.0
        %468 = vmatprep.subr.mxu0 0.0
        %469 = vmatpush1.xpose.msra.mxu0 0.0
        %470 = vmatprep.subr.mxu0 0.0
        %471 = vmatpush1.xpose.msra.mxu0 0.0
        %472 = vmatprep.subr.mxu0 0.0
        %473 = vmatpush1.xpose.msra.mxu0 0.0
        %474 = vmatprep.subr.mxu0 0.0
        %475 = vmatpush1.xpose.msra.mxu0 0.0
        %476 = vmatprep.subr.mxu0 0.0
        %477 = vmatpush1.xpose.msra.mxu0 0.0
        %478 = vmatprep.subr.mxu0 0.0
        %479 = vmatpush1.xpose.msra.mxu0 0.0
        %480 = vmatprep.subr.mxu0 0.0
        %481 = vmatpush1.xpose.msra.mxu0 0.0
        %482 = vmatprep.subr.mxu0 0.0
        %483 = vmatpush1.xpose.msra.mxu0 0.0
        %484 = vmatprep.subr.mxu0 0.0
        %485 = vmatpush1.xpose.msra.mxu0 0.0
        %486 = vmatprep.subr.mxu0 0.0
        %487 = vmatpush1.xpose.msra.mxu0 0.0
        %488 = vmatprep.subr.mxu0 0.0
        %489 = vmatpush1.xpose.msra.mxu0 0.0
        %490 = vmatprep.subr.mxu0 0.0
        %491 = vmatpush1.xpose.msra.mxu0 0.0
        %492 = vmatprep.subr.mxu0 0.0
        %493 = vmatpush1.xpose.msra.mxu0 0.0
        %494 = vmatprep.subr.mxu0 0.0
        %495 = vmatpush1.xpose.msra.mxu0 0.0
        %496 = vmatprep.subr.mxu0 0.0
        %497 = vmatpush1.xpose.msra.mxu0 0.0
        %498 = vmatprep.subr.mxu0 0.0
        %499 = vmatpush1.xpose.msra.mxu0 0.0
        %500 = vmatprep.subr.mxu0 0.0
        %501 = vmatpush1.xpose.msra.mxu0 0.0
        %502 = vmatprep.mubr.f32.mxu0 0.0
        %v503 = vand.u32 %v202, 4294901760
        %v504 = vsub.f32 %v202, %v503
        %505 = vmatmul.mubr.f32.gmra.mrb[0].mxu0 %v504
        %v506 = vpop.f32.mrb[0].mxu0
        %v507 = vadd.f32 %v419, %v506
        %v508 = vpop.f32.mrb[0].mxu0
        %509 = vdwg.mxu0
        %510 = vmatprep.subr.mxu0 0.0
        %v511 = vand.u32 %v205, 4294901760
        %512 = vmatpush1.xpose.msra.mxu0 %v511
        %513 = vmatprep.subr.mxu0 0.0
        %v514 = vand.u32 %v208, 4294901760
        %515 = vmatpush1.xpose.msra.mxu0 %v514
        %516 = vmatprep.subr.mxu0 0.0
        %v517 = vand.u32 %v211, 4294901760
        %518 = vmatpush1.xpose.msra.mxu0 %v517
        %519 = vmatprep.subr.mxu0 0.0
        %v520 = vand.u32 %v214, 4294901760
        %521 = vmatpush1.xpose.msra.mxu0 %v520
        %522 = vmatprep.subr.mxu0 0.0
        %v523 = vand.u32 %v217, 4294901760
        %524 = vmatpush1.xpose.msra.mxu0 %v523
        %525 = vmatprep.subr.mxu0 0.0
        %v526 = vand.u32 %v220, 4294901760
        %527 = vmatpush1.xpose.msra.mxu0 %v526
        %528 = vmatprep.subr.mxu0 0.0
        %v529 = vand.u32 %v223, 4294901760
        %530 = vmatpush1.xpose.msra.mxu0 %v529
        %531 = vmatprep.subr.mxu0 0.0
        %v532 = vand.u32 %v226, 4294901760
        %533 = vmatpush1.xpose.msra.mxu0 %v532
        %534 = vmatprep.subr.mxu0 0.0
        %535 = vmatpush1.xpose.msra.mxu0 0.0
        %536 = vmatprep.subr.mxu0 0.0
        %537 = vmatpush1.xpose.msra.mxu0 0.0
        %538 = vmatprep.subr.mxu0 0.0
        %539 = vmatpush1.xpose.msra.mxu0 0.0
        %540 = vmatprep.subr.mxu0 0.0
        %541 = vmatpush1.xpose.msra.mxu0 0.0
        %542 = vmatprep.subr.mxu0 0.0
        %543 = vmatpush1.xpose.msra.mxu0 0.0
        %544 = vmatprep.subr.mxu0 0.0
        %545 = vmatpush1.xpose.msra.mxu0 0.0
        %546 = vmatprep.subr.mxu0 0.0
        %547 = vmatpush1.xpose.msra.mxu0 0.0
        %548 = vmatprep.subr.mxu0 0.0
        %549 = vmatpush1.xpose.msra.mxu0 0.0
        %550 = vmatprep.subr.mxu0 0.0
        %551 = vmatpush1.xpose.msra.mxu0 0.0
        %552 = vmatprep.subr.mxu0 0.0
        %553 = vmatpush1.xpose.msra.mxu0 0.0
        %554 = vmatprep.subr.mxu0 0.0
        %555 = vmatpush1.xpose.msra.mxu0 0.0
        %556 = vmatprep.subr.mxu0 0.0
        %557 = vmatpush1.xpose.msra.mxu0 0.0
        %558 = vmatprep.subr.mxu0 0.0
        %559 = vmatpush1.xpose.msra.mxu0 0.0
        %560 = vmatprep.subr.mxu0 0.0
        %561 = vmatpush1.xpose.msra.mxu0 0.0
        %562 = vmatprep.subr.mxu0 0.0
        %563 = vmatpush1.xpose.msra.mxu0 0.0
        %564 = vmatprep.subr.mxu0 0.0
        %565 = vmatpush1.xpose.msra.mxu0 0.0
        %566 = vmatprep.subr.mxu0 0.0
        %567 = vmatpush1.xpose.msra.mxu0 0.0
        %568 = vmatprep.subr.mxu0 0.0
        %569 = vmatpush1.xpose.msra.mxu0 0.0
        %570 = vmatprep.subr.mxu0 0.0
        %571 = vmatpush1.xpose.msra.mxu0 0.0
        %572 = vmatprep.subr.mxu0 0.0
        %573 = vmatpush1.xpose.msra.mxu0 0.0
        %574 = vmatprep.subr.mxu0 0.0
        %575 = vmatpush1.xpose.msra.mxu0 0.0
        %576 = vmatprep.subr.mxu0 0.0
        %577 = vmatpush1.xpose.msra.mxu0 0.0
        %578 = vmatprep.subr.mxu0 0.0
        %579 = vmatpush1.xpose.msra.mxu0 0.0
        %580 = vmatprep.subr.mxu0 0.0
        %581 = vmatpush1.xpose.msra.mxu0 0.0
        %582 = vmatprep.mubr.f32.mxu0 0.0
        %v583 = vand.u32 %v202, 4294901760
        %v584 = vsub.f32 %v202, %v583
        %v585 = vand.u32 %v584, 4294901760
        %586 = vmatmul.mubr.f32.gmra.mrb[0].mxu0 %v585
        %v587 = vpop.f32.mrb[0].mxu0
        %v588 = vadd.f32 %v507, %v587
        %v589 = vpop.f32.mrb[0].mxu0
        %590 = vdwg.mxu0
        %591 = vmatprep.subr.mxu0 0.0
        %v592 = vand.u32 %v205, 4294901760
        %v593 = vsub.f32 %v205, %v592
        %v594 = vand.u32 %v593, 4294901760
        %595 = vmatpush1.xpose.msra.mxu0 %v594
        %596 = vmatprep.subr.mxu0 0.0
        %v597 = vand.u32 %v208, 4294901760
        %v598 = vsub.f32 %v208, %v597
        %v599 = vand.u32 %v598, 4294901760
        %600 = vmatpush1.xpose.msra.mxu0 %v599
        %601 = vmatprep.subr.mxu0 0.0
        %v602 = vand.u32 %v211, 4294901760
        %v603 = vsub.f32 %v211, %v602
        %v604 = vand.u32 %v603, 4294901760
        %605 = vmatpush1.xpose.msra.mxu0 %v604
        %606 = vmatprep.subr.mxu0 0.0
        %v607 = vand.u32 %v214, 4294901760
        %v608 = vsub.f32 %v214, %v607
        %v609 = vand.u32 %v608, 4294901760
        %610 = vmatpush1.xpose.msra.mxu0 %v609
        %611 = vmatprep.subr.mxu0 0.0
        %v612 = vand.u32 %v217, 4294901760
        %v613 = vsub.f32 %v217, %v612
        %v614 = vand.u32 %v613, 4294901760
        %615 = vmatpush1.xpose.msra.mxu0 %v614
        %616 = vmatprep.subr.mxu0 0.0
        %v617 = vand.u32 %v220, 4294901760
        %v618 = vsub.f32 %v220, %v617
        %v619 = vand.u32 %v618, 4294901760
        %620 = vmatpush1.xpose.msra.mxu0 %v619
        %621 = vmatprep.subr.mxu0 0.0
        %v622 = vand.u32 %v223, 4294901760
        %v623 = vsub.f32 %v223, %v622
        %v624 = vand.u32 %v623, 4294901760
        %625 = vmatpush1.xpose.msra.mxu0 %v624
        %626 = vmatprep.subr.mxu0 0.0
        %v627 = vand.u32 %v226, 4294901760
        %v628 = vsub.f32 %v226, %v627
        %v629 = vand.u32 %v628, 4294901760
        %630 = vmatpush1.xpose.msra.mxu0 %v629
        %631 = vmatprep.subr.mxu0 0.0
        %632 = vmatpush1.xpose.msra.mxu0 0.0
        %633 = vmatprep.subr.mxu0 0.0
        %634 = vmatpush1.xpose.msra.mxu0 0.0
        %635 = vmatprep.subr.mxu0 0.0
        %636 = vmatpush1.xpose.msra.mxu0 0.0
        %637 = vmatprep.subr.mxu0 0.0
        %638 = vmatpush1.xpose.msra.mxu0 0.0
        %639 = vmatprep.subr.mxu0 0.0
        %640 = vmatpush1.xpose.msra.mxu0 0.0
        %641 = vmatprep.subr.mxu0 0.0
        %642 = vmatpush1.xpose.msra.mxu0 0.0
        %643 = vmatprep.subr.mxu0 0.0
        %644 = vmatpush1.xpose.msra.mxu0 0.0
        %645 = vmatprep.subr.mxu0 0.0
        %646 = vmatpush1.xpose.msra.mxu0 0.0
        %647 = vmatprep.subr.mxu0 0.0
        %648 = vmatpush1.xpose.msra.mxu0 0.0
        %649 = vmatprep.subr.mxu0 0.0
        %650 = vmatpush1.xpose.msra.mxu0 0.0
        %651 = vmatprep.subr.mxu0 0.0
        %652 = vmatpush1.xpose.msra.mxu0 0.0
        %653 = vmatprep.subr.mxu0 0.0
        %654 = vmatpush1.xpose.msra.mxu0 0.0
        %655 = vmatprep.subr.mxu0 0.0
        %656 = vmatpush1.xpose.msra.mxu0 0.0
        %657 = vmatprep.subr.mxu0 0.0
        %658 = vmatpush1.xpose.msra.mxu0 0.0
        %659 = vmatprep.subr.mxu0 0.0
        %660 = vmatpush1.xpose.msra.mxu0 0.0
        %661 = vmatprep.subr.mxu0 0.0
        %662 = vmatpush1.xpose.msra.mxu0 0.0
        %663 = vmatprep.subr.mxu0 0.0
        %664 = vmatpush1.xpose.msra.mxu0 0.0
        %665 = vmatprep.subr.mxu0 0.0
        %666 = vmatpush1.xpose.msra.mxu0 0.0
        %667 = vmatprep.subr.mxu0 0.0
        %668 = vmatpush1.xpose.msra.mxu0 0.0
        %669 = vmatprep.subr.mxu0 0.0
        %670 = vmatpush1.xpose.msra.mxu0 0.0
        %671 = vmatprep.subr.mxu0 0.0
        %672 = vmatpush1.xpose.msra.mxu0 0.0
        %673 = vmatprep.subr.mxu0 0.0
        %674 = vmatpush1.xpose.msra.mxu0 0.0
        %675 = vmatprep.subr.mxu0 0.0
        %676 = vmatpush1.xpose.msra.mxu0 0.0
        %677 = vmatprep.subr.mxu0 0.0
        %678 = vmatpush1.xpose.msra.mxu0 0.0
        %679 = vmatprep.mubr.f32.mxu0 0.0
        %v680 = vand.u32 %v202, 4294901760
        %681 = vmatmul.mubr.f32.gmra.mrb[0].mxu0 %v680
        %v682 = vpop.f32.mrb[0].mxu0
        %v683 = vadd.f32 %v588, %v682
        %v684 = vpop.f32.mrb[0].mxu0
        %685 = vdwg.mxu0
        %686 = vmatprep.subr.mxu0 0.0
        %v687 = vand.u32 %v205, 4294901760
        %688 = vmatpush1.xpose.msra.mxu0 %v687
        %689 = vmatprep.subr.mxu0 0.0
        %v690 = vand.u32 %v208, 4294901760
        %691 = vmatpush1.xpose.msra.mxu0 %v690
        %692 = vmatprep.subr.mxu0 0.0
        %v693 = vand.u32 %v211, 4294901760
        %694 = vmatpush1.xpose.msra.mxu0 %v693
        %695 = vmatprep.subr.mxu0 0.0
        %v696 = vand.u32 %v214, 4294901760
        %697 = vmatpush1.xpose.msra.mxu0 %v696
        %698 = vmatprep.subr.mxu0 0.0
        %v699 = vand.u32 %v217, 4294901760
        %700 = vmatpush1.xpose.msra.mxu0 %v699
        %701 = vmatprep.subr.mxu0 0.0
        %v702 = vand.u32 %v220, 4294901760
        %703 = vmatpush1.xpose.msra.mxu0 %v702
        %704 = vmatprep.subr.mxu0 0.0
        %v705 = vand.u32 %v223, 4294901760
        %706 = vmatpush1.xpose.msra.mxu0 %v705
        %707 = vmatprep.subr.mxu0 0.0
        %v708 = vand.u32 %v226, 4294901760
        %709 = vmatpush1.xpose.msra.mxu0 %v708
        %710 = vmatprep.subr.mxu0 0.0
        %711 = vmatpush1.xpose.msra.mxu0 0.0
        %712 = vmatprep.subr.mxu0 0.0
        %713 = vmatpush1.xpose.msra.mxu0 0.0
        %714 = vmatprep.subr.mxu0 0.0
        %715 = vmatpush1.xpose.msra.mxu0 0.0
        %716 = vmatprep.subr.mxu0 0.0
        %717 = vmatpush1.xpose.msra.mxu0 0.0
        %718 = vmatprep.subr.mxu0 0.0
        %719 = vmatpush1.xpose.msra.mxu0 0.0
        %720 = vmatprep.subr.mxu0 0.0
        %721 = vmatpush1.xpose.msra.mxu0 0.0
        %722 = vmatprep.subr.mxu0 0.0
        %723 = vmatpush1.xpose.msra.mxu0 0.0
        %724 = vmatprep.subr.mxu0 0.0
        %725 = vmatpush1.xpose.msra.mxu0 0.0
        %726 = vmatprep.subr.mxu0 0.0
        %727 = vmatpush1.xpose.msra.mxu0 0.0
        %728 = vmatprep.subr.mxu0 0.0
        %729 = vmatpush1.xpose.msra.mxu0 0.0
        %730 = vmatprep.subr.mxu0 0.0
        %731 = vmatpush1.xpose.msra.mxu0 0.0
        %732 = vmatprep.subr.mxu0 0.0
        %733 = vmatpush1.xpose.msra.mxu0 0.0
        %734 = vmatprep.subr.mxu0 0.0
        %735 = vmatpush1.xpose.msra.mxu0 0.0
        %736 = vmatprep.subr.mxu0 0.0
        %737 = vmatpush1.xpose.msra.mxu0 0.0
        %738 = vmatprep.subr.mxu0 0.0
        %739 = vmatpush1.xpose.msra.mxu0 0.0
        %740 = vmatprep.subr.mxu0 0.0
        %741 = vmatpush1.xpose.msra.mxu0 0.0
        %742 = vmatprep.subr.mxu0 0.0
        %743 = vmatpush1.xpose.msra.mxu0 0.0
        %744 = vmatprep.subr.mxu0 0.0
        %745 = vmatpush1.xpose.msra.mxu0 0.0
        %746 = vmatprep.subr.mxu0 0.0
        %747 = vmatpush1.xpose.msra.mxu0 0.0
        %748 = vmatprep.subr.mxu0 0.0
        %749 = vmatpush1.xpose.msra.mxu0 0.0
        %750 = vmatprep.subr.mxu0 0.0
        %751 = vmatpush1.xpose.msra.mxu0 0.0
        %752 = vmatprep.subr.mxu0 0.0
        %753 = vmatpush1.xpose.msra.mxu0 0.0
        %754 = vmatprep.subr.mxu0 0.0
        %755 = vmatpush1.xpose.msra.mxu0 0.0
        %756 = vmatprep.subr.mxu0 0.0
        %757 = vmatpush1.xpose.msra.mxu0 0.0
        %758 = vmatprep.mubr.f32.mxu0 0.0
        %v759 = vand.u32 %v202, 4294901760
        %760 = vmatmul.mubr.f32.gmra.mrb[0].mxu0 %v759
        %v761 = vpop.f32.mrb[0].mxu0
        %v762 = vadd.f32 %v683, %v761
        %v763 = vpop.f32.mrb[0].mxu0
        %764 = vdwg.mxu0
        %s765 = sld [smem:[#allocation2]]
        %v766 = vstv %s765
        %v767 = vadd.f32 %v762, %v766
        %v768 = vsub.f32 0.0, %v767
        %v769 = vmul.f32 %v768, 1.442695
        %v770 = vpow.pop %v769
        %v771 = vadd.f32 %v770, 1.0
        %v772 = vrcp.pop %v771
        %v773 = vmul.f32 1.0, %v772
        %vm774 = vcmask 516096
        %775 = vst.msk [vmem:[%s176] sm:$0x1] %vm774, %v773
        %s776 = sand.u32 %s94, 1
        %s777 = scalar_lea.sflag [#allocation4], %s776
        %s778 = sand.u32 %s94, 1
        %s779 = scalar_lea.vmem [#allocation3], %s778
        // Predicated region
        $region33: #{tpu_custom_call.1} parent=31 // pred_check
          %p780 = pneg %p104
        $region34: #{tpu_custom_call.1} parent=31 // pred_check_branch
          %782 = sbr.rel (%p780) target = $region36
        $region35: #{tpu_custom_call.1} parent=31 // pred_region
          %s784 = ssub.s32 16, 16
          %785 = vsyncadd %s777, %s784
          %s786 = smul.addr %s18, 16
          %s787 = scalar_lea.hbm %s3, %s786
          %s789 = sshll.u32 %s779, 4
          %s790 = int_to_ptr.vmem [resolvable:$true] %s789
          %792 = dma.vmem_to_hbm [thread:$0]  %s790, 16, %s787, %s777
        $region36: #{tpu_custom_call.1} parent=31 // pred_fallthru
          _
      $region32: #{tpu_custom_call.1} parent=5 // pred_fallthru
        _
      %p793 = scmp.le.s32.totalorder 2, %s13
      // Predicated region
      $region37: #{tpu_custom_call.1} parent=5 // pred_check
        %p794 = pneg %p793
      $region38: #{tpu_custom_call.1} parent=5 // pred_check_branch
        %796 = sbr.rel (%p794) target = $region40
      $region39: #{tpu_custom_call.1} parent=5 // pred_region
        %s797 = ssub.s32 %s13, 2
        // Predicated region
        $region41: #{tpu_custom_call.1} parent=39 // pred_check
          %p798 = pneg %p110
        $region42: #{tpu_custom_call.1} parent=39 // pred_check_branch
          %800 = sbr.rel (%p798) target = $region44
        $region43: #{tpu_custom_call.1} parent=39 // pred_region
          %s801 = sand.u32 %s95, 1
          %s802 = scalar_lea.sflag [#allocation4], %s801
          %s803 = sand.u32 %s95, 1
          %s804 = scalar_lea.vmem [#allocation3], %s803
          %805 = dma.done %s802, 16
        $region44: #{tpu_custom_call.1} parent=39 // pred_fallthru
          _
      $region40: #{tpu_custom_call.1} parent=5 // pred_fallthru
        _
    $region6: #{tpu_custom_call.1} parent=1 // loop_footer
      %s17 = sadd.s32 1, %s13
    $region7: #{tpu_custom_call.1} parent=1 // loop_footer_branch
      %12 = sbr.rel target = $region3
    $region8: #{tpu_custom_call.1} parent=1 // loop_exit
      _
    %806 = vsyncpa [#allocation4], 1
    %s807 = scalar_lea.sflag [#allocation4], 1
    %808 = vsyncpa %s807, 1

</llo_original>
